<compile_context>
chip_gen: v6e
topology: v6e:2x2x1
jax: 0.10.0
libtpu: 0.0.40
codegen_flags: <defaults>
</compile_context>

<pallas_src>
import functools

import jax
import jax.numpy as jnp
from jax.experimental import pallas as pl
from jax.experimental.pallas import tpu as pltpu


def _mgl_kernel(x_ref, w_in_ref, b_in_ref, w_out_ref, b_out_ref, o_ref,
                *, num_moments):
    """One grid step == one block of bB batch rows.

    x_ref     : [bB, T, F]       VMEM tile of the input
    w_in_ref  : [F, H]           linear_in weight (x @ W form)
    b_in_ref  : [1, H]
    w_out_ref : [M*H, O]         linear_out weight, flattened moment-major
    b_out_ref : [1, O]
    o_ref     : [bB, O]
    """
    bB, T, F = x_ref.shape
    H = w_in_ref.shape[1]

    # linear_in: fold batch into the MXU M dimension -> one [bB*T, F]@[F, H].
    x2d = x_ref[...].reshape(bB * T, F)
    h = jnp.dot(x2d, w_in_ref[...], preferred_element_type=jnp.float32)
    h = (h + b_in_ref[...]).reshape(bB, T, H)                       # [bB, T, H]

    # moments over the time axis (f32 throughout).
    mean = jnp.mean(h, axis=1)                                      # [bB, H]
    centered = h - mean[:, None, :]                                 # [bB, T, H]
    var = jnp.sum(centered * centered, axis=1) / float(T - 1)
    std = jnp.sqrt(var)                                             # unbiased std

    moments = [mean, std]
    if num_moments >= 3:
        # z = centered / std, built once; higher moments reuse a running power
        # (z_pow *= z) instead of centered**t / std**t per t.
        # (approx=True would push this to the EUP but loosens precision vs the
        #  f32 reference, so keep the exact reciprocal.)
        inv_std = pl.reciprocal(std, approx=False)                  # [bB, H]
        z = centered * inv_std[:, None, :]                          # [bB, T, H]
        z_pow = z * z                                               # z^2
        for _t in range(3, num_moments + 1):
            z_pow = z_pow * z                                       # z^t
            moments.append(jnp.mean(z_pow, axis=1))                 # [bB, H]

    # linear_out: one GEMM on the flattened (moment-major) moment vector.
    flat = jnp.concatenate(moments, axis=1)                         # [bB, M*H]
    out = jnp.dot(flat, w_out_ref[...],
                  preferred_element_type=jnp.float32) + b_out_ref[...]
    o_ref[...] = out.astype(o_ref.dtype)                            # [bB, O]


def mgl_forward(packed_input, w_in, b_in, w_out3d, b_out,
                *, num_moments, block_b=8):
    """packed_input mimics PyTorch's PackedSequence-style tuple."""
    x, _batch_sizes, _sorted_idx, _unsorted_idx = packed_input
    B, T, F = x.shape
    H = w_in.shape[1]
    O = w_out3d.shape[2]
    assert w_out3d.shape == (num_moments, H, O)

    # flatten linear_out weight moment-major: row block m corresponds to moment m.
    w_out_flat = w_out3d.reshape(num_moments * H, O)

    # Batch blocking.  Pad B up to a multiple of bB (padded rows are computed
    # independently and sliced off; they never contaminate real rows).
    bB = min(block_b, B)
    B_pad = pl.cdiv(B, bB) * bB
    if B_pad != B:
        x = jnp.pad(x, ((0, B_pad - B), (0, 0), (0, 0)))

    kernel = functools.partial(_mgl_kernel, num_moments=num_moments)

    out = pl.pallas_call(
        kernel,
        out_shape=jax.ShapeDtypeStruct((B_pad, O), x.dtype),
        grid=(B_pad // bB,),
        in_specs=[
            pl.BlockSpec((bB, T, F), lambda i: (i, 0, 0)),            # x block
            pl.BlockSpec((F, H), lambda i: (0, 0)),                   # W_in
            pl.BlockSpec((1, H), lambda i: (0, 0)),                   # b_in
            pl.BlockSpec((num_moments * H, O), lambda i: (0, 0)),     # W_out (flat)
            pl.BlockSpec((1, O), lambda i: (0, 0)),                   # b_out
        ],
        out_specs=pl.BlockSpec((bB, O), lambda i: (i, 0)),
        compiler_params=pltpu.CompilerParams(
            dimension_semantics=("parallel",),
            vmem_limit_bytes=32 * 1024 * 1024),
    )(x, w_in, b_in, w_out_flat, b_out)
    return out[:B]


def mgl_reference(x, w_in, b_in, w_out3d, b_out, *, num_moments):
    """Pure-JAX reference of the same math (for correctness check)."""
    h = jnp.einsum("btf,fh->bth", x, w_in) + b_in                   # [B, T, H]
    T = h.shape[1]
    mean = jnp.mean(h, axis=1, keepdims=True)                       # [B, 1, H]
    centered = h - mean
    std = jnp.sqrt(jnp.sum(centered ** 2, axis=1, keepdims=True) / (T - 1))
    moments = [mean, std]
    for t in range(3, num_moments + 1):
        moments.append(jnp.mean(centered ** t, axis=1, keepdims=True) / (std ** t))
    m = jnp.concatenate(moments, axis=1)                            # [B, M, H]
    flat = m.reshape(m.shape[0], -1)                                # [B, M*H]
    w_out_flat = w_out3d.reshape(-1, w_out3d.shape[-1])             # [M*H, O]
    return flat @ w_out_flat + b_out                                # [B, O]


if __name__ == "__main__":
    # Small shapes consistent with the module defaults (B chosen so the batch
    # blocking yields a grid of length 2, exercising the pipelined grid).
    B, T = 16, 8
    in_features = 16
    num_moments = 4
    hidden_features = in_features                     # default in __init__
    out_features = in_features * num_moments          # default in __init__ -> 64

    key = jax.random.PRNGKey(0)
    kx, kw1, kb1, kw2, kb2 = jax.random.split(key, 5)

    x = jax.random.normal(kx, (B, T, in_features), dtype=jnp.float32)
    # deterministic parameter init (synthetic; not loaded from a checkpoint)
    w_in = jax.random.normal(kw1, (in_features, hidden_features),
                             dtype=jnp.float32) * 0.1
    b_in = jax.random.normal(kb1, (1, hidden_features), dtype=jnp.float32) * 0.1
    w_out3d = jax.random.normal(
        kw2, (num_moments, hidden_features, out_features),
        dtype=jnp.float32) * 0.1
    b_out = jax.random.normal(kb2, (1, out_features), dtype=jnp.float32) * 0.1

    # PackedSequence-style tuple (metadata unused, as in the reference forward)
    batch_sizes = jnp.full((T,), B, dtype=jnp.int32)
    sorted_indices = jnp.arange(B, dtype=jnp.int32)
    unsorted_indices = jnp.arange(B, dtype=jnp.int32)
    packed = (x, batch_sizes, sorted_indices, unsorted_indices)

    out = mgl_forward(packed, w_in, b_in, w_out3d, b_out,
                      num_moments=num_moments, block_b=8)
    out = jax.block_until_ready(out)

    ref = mgl_reference(x, w_in, b_in, w_out3d, b_out,
                        num_moments=num_moments)
    assert out.shape == (B, out_features), out.shape
    assert jnp.allclose(out, ref, atol=1e-4, rtol=1e-4), (
        float(jnp.max(jnp.abs(out - ref))))

    print("KERNEL_OK")
</pallas_src>

<mosaic_0001>
module attributes {stable_mosaic.version = 11 : i64} {
  func.func @_mgl_kernel(%arg0: i32, %arg1: memref<8x8x16xf32, #tpu.memory_space<vmem>>, %arg2: memref<16x16xf32, #tpu.memory_space<vmem>>, %arg3: memref<1x16xf32, #tpu.memory_space<vmem>>, %arg4: memref<64x64xf32, #tpu.memory_space<vmem>>, %arg5: memref<1x64xf32, #tpu.memory_space<vmem>>, %arg6: memref<8x64xf32, #tpu.memory_space<vmem>>) attributes {dimension_semantics = [#tpu.dimension_semantics<parallel>], iteration_bounds = array<i64: 2>, scalar_prefetch = 0 : i64, scratch_operands = 0 : i64, tpu.core_type = #tpu.core_type<tc>, window_params = [{transform_indices = @transform_0, window_bounds = array<i64: 8, 8, 16>}, {pipeline_mode = #tpu.pipeline_mode<synchronous>, transform_indices = @transform_1, window_bounds = array<i64: 16, 16>}, {pipeline_mode = #tpu.pipeline_mode<synchronous>, transform_indices = @transform_2, window_bounds = array<i64: 1, 16>}, {pipeline_mode = #tpu.pipeline_mode<synchronous>, transform_indices = @transform_3, window_bounds = array<i64: 64, 64>}, {pipeline_mode = #tpu.pipeline_mode<synchronous>, transform_indices = @transform_4, window_bounds = array<i64: 1, 64>}, {transform_indices = @transform_5, window_bounds = array<i64: 8, 64>}]} {
    %c0 = arith.constant 0 : index
    %c0_0 = arith.constant 0 : index
    %c0_1 = arith.constant 0 : index
    %0 = vector.load %arg1[%c0, %c0_0, %c0_1] : memref<8x8x16xf32, #tpu.memory_space<vmem>>, vector<8x8x16xf32>
    %1 = vector.shape_cast %0 : vector<8x8x16xf32> to vector<64x16xf32>
    %c0_2 = arith.constant 0 : index
    %c0_3 = arith.constant 0 : index
    %2 = vector.load %arg2[%c0_2, %c0_3] : memref<16x16xf32, #tpu.memory_space<vmem>>, vector<16x16xf32>
    %cst = arith.constant dense<0.000000e+00> : vector<64x16xf32>
    %3 = tpu.matmul %1, %2, %cst {dimension_numbers = #tpu.dot_dimension_numbers<[1], [0], [0], [1], [0, 0, 1, 1], [], []>} : vector<64x16xf32>, vector<16x16xf32>, vector<64x16xf32> -> vector<64x16xf32>
    %c0_4 = arith.constant 0 : index
    %c0_5 = arith.constant 0 : index
    %4 = vector.load %arg3[%c0_4, %c0_5] : memref<1x16xf32, #tpu.memory_space<vmem>>, vector<1x16xf32>
    %5 = vector.broadcast %4 : vector<1x16xf32> to vector<64x16xf32>
    %6 = arith.addf %3, %5 : vector<64x16xf32>
    %7 = vector.shape_cast %6 : vector<64x16xf32> to vector<8x8x16xf32>
    %cst_6 = arith.constant dense<0.000000e+00> : vector<8x16xf32>
    %8 = vector.multi_reduction <add>, %7, %cst_6 [1] : vector<8x8x16xf32> to vector<8x16xf32>
    %cst_7 = arith.constant 8.000000e+00 : f32
    %9 = vector.broadcast %cst_7 : f32 to vector<8x16xf32>
    %10 = arith.divf %8, %9 : vector<8x16xf32>
    %11 = vector.shape_cast %10 : vector<8x16xf32> to vector<8x1x16xf32>
    %12 = vector.broadcast %11 : vector<8x1x16xf32> to vector<8x8x16xf32>
    %13 = arith.subf %7, %12 : vector<8x8x16xf32>
    %14 = arith.mulf %13, %13 : vector<8x8x16xf32>
    %cst_8 = arith.constant dense<0.000000e+00> : vector<8x16xf32>
    %15 = vector.multi_reduction <add>, %14, %cst_8 [1] : vector<8x8x16xf32> to vector<8x16xf32>
    %cst_9 = arith.constant 7.000000e+00 : f32
    %16 = vector.broadcast %cst_9 : f32 to vector<8x16xf32>
    %17 = arith.divf %15, %16 : vector<8x16xf32>
    %18 = math.sqrt %17 : vector<8x16xf32>
    %19 = tpu.reciprocal %18 : vector<8x16xf32> -> vector<8x16xf32>
    %20 = vector.shape_cast %19 : vector<8x16xf32> to vector<8x1x16xf32>
    %21 = vector.broadcast %20 : vector<8x1x16xf32> to vector<8x8x16xf32>
    %22 = arith.mulf %13, %21 : vector<8x8x16xf32>
    %23 = arith.mulf %22, %22 : vector<8x8x16xf32>
    %24 = arith.mulf %23, %22 : vector<8x8x16xf32>
    %cst_10 = arith.constant dense<0.000000e+00> : vector<8x16xf32>
    %25 = vector.multi_reduction <add>, %24, %cst_10 [1] : vector<8x8x16xf32> to vector<8x16xf32>
    %cst_11 = arith.constant 8.000000e+00 : f32
    %26 = vector.broadcast %cst_11 : f32 to vector<8x16xf32>
    %27 = arith.divf %25, %26 : vector<8x16xf32>
    %28 = arith.mulf %24, %22 : vector<8x8x16xf32>
    %cst_12 = arith.constant dense<0.000000e+00> : vector<8x16xf32>
    %29 = vector.multi_reduction <add>, %28, %cst_12 [1] : vector<8x8x16xf32> to vector<8x16xf32>
    %cst_13 = arith.constant 8.000000e+00 : f32
    %30 = vector.broadcast %cst_13 : f32 to vector<8x16xf32>
    %31 = arith.divf %29, %30 : vector<8x16xf32>
    %32 = tpu.concatenate %10, %18, %27, %31 in 1 : vector<8x16xf32>, vector<8x16xf32>, vector<8x16xf32>, vector<8x16xf32> -> vector<8x64xf32>
    %c0_14 = arith.constant 0 : index
    %c0_15 = arith.constant 0 : index
    %33 = vector.load %arg4[%c0_14, %c0_15] : memref<64x64xf32, #tpu.memory_space<vmem>>, vector<64x64xf32>
    %cst_16 = arith.constant dense<0.000000e+00> : vector<8x64xf32>
    %34 = tpu.matmul %32, %33, %cst_16 {dimension_numbers = #tpu.dot_dimension_numbers<[1], [0], [0], [1], [0, 0, 1, 1], [], []>} : vector<8x64xf32>, vector<64x64xf32>, vector<8x64xf32> -> vector<8x64xf32>
    %c0_17 = arith.constant 0 : index
    %c0_18 = arith.constant 0 : index
    %35 = vector.load %arg5[%c0_17, %c0_18] : memref<1x64xf32, #tpu.memory_space<vmem>>, vector<1x64xf32>
    %36 = vector.broadcast %35 : vector<1x64xf32> to vector<8x64xf32>
    %37 = arith.addf %34, %36 : vector<8x64xf32>
    %c0_19 = arith.constant 0 : index
    %c0_20 = arith.constant 0 : index
    %38 = vector.load %arg6[%c0_19, %c0_20] : memref<8x64xf32, #tpu.memory_space<vmem>>, vector<8x64xf32>
    tpu.vector_store %arg6[%c0_19, %c0_20], %37 {strides = array<i32>} : memref<8x64xf32, #tpu.memory_space<vmem>>, vector<8x64xf32>,
    return
  }
  func.func @transform_0(%arg0: i32) -> (i32, i32, i32) {
    %c0_i32 = arith.constant 0 : i32
    %c0_i32_0 = arith.constant 0 : i32
    %c0_i32_1 = arith.constant 0 : i32
    return %arg0, %c0_i32, %c0_i32_0 : i32, i32, i32
  }
  func.func @transform_1(%arg0: i32) -> (i32, i32) {
    %c0_i32 = arith.constant 0 : i32
    %c0_i32_0 = arith.constant 0 : i32
    %c0_i32_1 = arith.constant 0 : i32
    return %c0_i32, %c0_i32_0 : i32, i32
  }
  func.func @transform_2(%arg0: i32) -> (i32, i32) {
    %c0_i32 = arith.constant 0 : i32
    %c0_i32_0 = arith.constant 0 : i32
    %c0_i32_1 = arith.constant 0 : i32
    return %c0_i32, %c0_i32_0 : i32, i32
  }
  func.func @transform_3(%arg0: i32) -> (i32, i32) {
    %c0_i32 = arith.constant 0 : i32
    %c0_i32_0 = arith.constant 0 : i32
    %c0_i32_1 = arith.constant 0 : i32
    return %c0_i32, %c0_i32_0 : i32, i32
  }
  func.func @transform_4(%arg0: i32) -> (i32, i32) {
    %c0_i32 = arith.constant 0 : i32
    %c0_i32_0 = arith.constant 0 : i32
    %c0_i32_1 = arith.constant 0 : i32
    return %c0_i32, %c0_i32_0 : i32, i32
  }
  func.func @transform_5(%arg0: i32) -> (i32, i32) {
    %c0_i32 = arith.constant 0 : i32
    %c0_i32_0 = arith.constant 0 : i32
    return %arg0, %c0_i32 : i32, i32
  }
}

</mosaic_0001>

<llo_original>
// kernel: tpu_custom_call.1
$region0: #{tpu_custom_call.1}
  #allocation0 [shape = 'u32[]', space=smem, size = 0x4, offset = 0x4, fixed_abs, tag = 'smem constant byte address 0x4 - core index']
  #allocation1 [shape = 'u32[144,128]{1,0:T(1,128)}', space=vmem, size = 0x12000, scoped, tag = 'internal scratch']
  %s0 = inlined_call_operand.hbm [shape: f32[16,8,16], index: 0, kind: input, shape index: {}]
  %s1 = inlined_call_operand.hbm [shape: f32[16,16], index: 1, kind: input, shape index: {}]
  %s2 = inlined_call_operand.vmem [shape: f32[1,16], index: 2, kind: input, shape index: {}]
  %s3 = inlined_call_operand.hbm [shape: f32[64,64], index: 3, kind: input, shape index: {}]
  %s4 = inlined_call_operand.vmem [shape: f32[1,64], index: 4, kind: input, shape index: {}]
  %s5 = inlined_call_operand.hbm [shape: f32[16,64], index: 5, kind: output, shape index: {}]
  %s6 = sld [smem:[#allocation0]]
  $region65: #{tpu_custom_call.1} parent=0
    _
  %s8 = ssub.s32 1, %s6
  %s9 = scalar_select 0, %s8, %s6
  $region1: #{tpu_custom_call.1} parent=0
    #allocation2 [shape = 'u8[65536]{0}', space=vmem, size = 0x10000, scoped, tag = 'input window, operand 0']
    #allocation3 [shape = 's32[2]{0}', space=sflag, size = 0x8, scoped, tag = 'scoped memory for tpu_custom_call.1']
    #allocation4 [shape = 's32[2]{0}', space=sflag, size = 0x8, scoped, tag = 'scoped memory for tpu_custom_call.1']
    #allocation5 [shape = 'u8[8192]{0}', space=vmem, size = 0x2000, scoped, tag = 'input window, operand 1, single buffered']
    #allocation6 [shape = 's32[1]{0}', space=sflag, size = 0x4, scoped, tag = 'scoped memory for tpu_custom_call.1']
    #allocation7 [shape = 'u8[32768]{0}', space=vmem, size = 0x8000, scoped, tag = 'input window, operand 3, single buffered']
    #allocation8 [shape = 'u8[8192]{0}', space=vmem, size = 0x2000, scoped, tag = 'output window, operand 0']
    %10 = vsyncpa [#allocation3], 0
    %s11 = scalar_lea.sflag [#allocation3], 1
    %12 = vsyncpa %s11, 0
    %13 = vsyncpa [#allocation6], 0
    %14 = vsyncpa [#allocation4], 0
    %s15 = scalar_lea.sflag [#allocation4], 1
    %16 = vsyncpa %s15, 0
    loop: start=0, step=1, limit=4
    $region2: #{tpu_custom_call.1} parent=1 // loop_pre_header
      _
    $region3: #{tpu_custom_call.1} parent=1 // loop_header
      %s18 = sphi 0, %s22
      %p19 = scmp.ge.s32.totalorder %s18, 4
      %s28 = sphi 0, %s30
      %s31 = sphi 0, %s28
      %s32 = sphi 0, %s31
      %s48 = sphi 0, %s32
      %s52 = sphi 0, %s52
      %s54 = sphi 0, %s52
      %s55 = sphi 0, %s54
      %s69 = sphi 0, %s55
      %s73 = sphi 0, %s73
      %s75 = sphi 0, %s73
      %s76 = sphi 0, %s75
      %s90 = sphi 0, %s76
      %s94 = sphi 0, %s94
      %s96 = sphi 0, %s94
      %s97 = sphi 0, %s96
      %s111 = sphi 0, %s97
      %s115 = sphi 0, %s115
      %s117 = sphi 0, %s115
      %s118 = sphi 0, %s117
      %s132 = sphi 0, %s118
      %s138 = sphi 0, %s140
      %s141 = sphi 0, %s138
      %s142 = sphi 0, %s141
      %s158 = sphi 0, %s142
    $region4: #{tpu_custom_call.1} parent=1 // loop_header_branch
      %21 = sbr.rel (%p19) target = $region8
    $region5: #{tpu_custom_call.1} parent=1 // loop_body
      %s23 = ssub.s32 %s18, 1
      %s24 = ssub.s32 %s18, 2
      %s25 = sadd.s32 %s18, 1
      %s26 = ssub.s32 %s18, %s25
      %p27 = scmp.eq.s32.totalorder %s26, 0
      %s29 = sadd.s32 %s28, 1
      %s30 = scalar_select %p27, %s28, %s29
      %p33 = pneg %p27
      %p34 = scmp.eq.s32.totalorder %s18, 1
      %p35 = por %p33, %p34
      %p36 = scmp.ne.s32.totalorder %s28, %s31
      %p37 = scmp.eq.s32.totalorder %s18, 0
      %p38 = por %p36, %p37
      %p39 = scmp.ne.s32.totalorder %s28, %s31
      %p40 = scmp.eq.s32.totalorder %s23, 1
      %p41 = por %p39, %p40
      %p42 = scmp.ne.s32.totalorder %s31, %s32
      %p43 = scmp.eq.s32.totalorder %s23, 0
      %p44 = por %p42, %p43
      %p45 = scmp.ne.s32.totalorder %s31, %s32
      %p46 = scmp.eq.s32.totalorder %s24, 1
      %p47 = por %p45, %p46
      %p49 = scmp.ne.s32.totalorder %s32, %s48
      %p50 = scmp.eq.s32.totalorder %s24, 0
      %p51 = por %p49, %p50
      %s53 = sadd.s32 %s52, 1
      %p56 = scmp.eq.s32.totalorder %s18, 1
      %p57 = scmp.ne.s32.totalorder %s52, %s54
      %p58 = scmp.eq.s32.totalorder %s18, 0
      %p59 = por %p57, %p58
      %p60 = scmp.ne.s32.totalorder %s52, %s54
      %p61 = scmp.eq.s32.totalorder %s23, 1
      %p62 = por %p60, %p61
      %p63 = scmp.ne.s32.totalorder %s54, %s55
      %p64 = scmp.eq.s32.totalorder %s23, 0
      %p65 = por %p63, %p64
      %p66 = scmp.ne.s32.totalorder %s54, %s55
      %p67 = scmp.eq.s32.totalorder %s24, 1
      %p68 = por %p66, %p67
      %p70 = scmp.ne.s32.totalorder %s55, %s69
      %p71 = scmp.eq.s32.totalorder %s24, 0
      %p72 = por %p70, %p71
      %s74 = sadd.s32 %s73, 1
      %p77 = scmp.eq.s32.totalorder %s18, 1
      %p78 = scmp.ne.s32.totalorder %s73, %s75
      %p79 = scmp.eq.s32.totalorder %s18, 0
      %p80 = por %p78, %p79
      %p81 = scmp.ne.s32.totalorder %s73, %s75
      %p82 = scmp.eq.s32.totalorder %s23, 1
      %p83 = por %p81, %p82
      %p84 = scmp.ne.s32.totalorder %s75, %s76
      %p85 = scmp.eq.s32.totalorder %s23, 0
      %p86 = por %p84, %p85
      %p87 = scmp.ne.s32.totalorder %s75, %s76
      %p88 = scmp.eq.s32.totalorder %s24, 1
      %p89 = por %p87, %p88
      %p91 = scmp.ne.s32.totalorder %s76, %s90
      %p92 = scmp.eq.s32.totalorder %s24, 0
      %p93 = por %p91, %p92
      %s95 = sadd.s32 %s94, 1
      %p98 = scmp.eq.s32.totalorder %s18, 1
      %p99 = scmp.ne.s32.totalorder %s94, %s96
      %p100 = scmp.eq.s32.totalorder %s18, 0
      %p101 = por %p99, %p100
      %p102 = scmp.ne.s32.totalorder %s94, %s96
      %p103 = scmp.eq.s32.totalorder %s23, 1
      %p104 = por %p102, %p103
      %p105 = scmp.ne.s32.totalorder %s96, %s97
      %p106 = scmp.eq.s32.totalorder %s23, 0
      %p107 = por %p105, %p106
      %p108 = scmp.ne.s32.totalorder %s96, %s97
      %p109 = scmp.eq.s32.totalorder %s24, 1
      %p110 = por %p108, %p109
      %p112 = scmp.ne.s32.totalorder %s97, %s111
      %p113 = scmp.eq.s32.totalorder %s24, 0
      %p114 = por %p112, %p113
      %s116 = sadd.s32 %s115, 1
      %p119 = scmp.eq.s32.totalorder %s18, 1
      %p120 = scmp.ne.s32.totalorder %s115, %s117
      %p121 = scmp.eq.s32.totalorder %s18, 0
      %p122 = por %p120, %p121
      %p123 = scmp.ne.s32.totalorder %s115, %s117
      %p124 = scmp.eq.s32.totalorder %s23, 1
      %p125 = por %p123, %p124
      %p126 = scmp.ne.s32.totalorder %s117, %s118
      %p127 = scmp.eq.s32.totalorder %s23, 0
      %p128 = por %p126, %p127
      %p129 = scmp.ne.s32.totalorder %s117, %s118
      %p130 = scmp.eq.s32.totalorder %s24, 1
      %p131 = por %p129, %p130
      %p133 = scmp.ne.s32.totalorder %s118, %s132
      %p134 = scmp.eq.s32.totalorder %s24, 0
      %p135 = por %p133, %p134
      %s136 = ssub.s32 %s18, %s25
      %p137 = scmp.eq.s32.totalorder %s136, 0
      %s139 = sadd.s32 %s138, 1
      %s140 = scalar_select %p137, %s138, %s139
      %p143 = pneg %p137
      %p144 = scmp.eq.s32.totalorder %s18, 1
      %p145 = por %p143, %p144
      %p146 = scmp.ne.s32.totalorder %s138, %s141
      %p147 = scmp.eq.s32.totalorder %s18, 0
      %p148 = por %p146, %p147
      %p149 = scmp.ne.s32.totalorder %s138, %s141
      %p150 = scmp.eq.s32.totalorder %s23, 1
      %p151 = por %p149, %p150
      %p152 = scmp.ne.s32.totalorder %s141, %s142
      %p153 = scmp.eq.s32.totalorder %s23, 0
      %p154 = por %p152, %p153
      %p155 = scmp.ne.s32.totalorder %s141, %s142
      %p156 = scmp.eq.s32.totalorder %s24, 1
      %p157 = por %p155, %p156
      %p159 = scmp.ne.s32.totalorder %s142, %s158
      %p160 = scmp.eq.s32.totalorder %s24, 0
      %p161 = por %p159, %p160
      %p162 = scmp.le.s32.totalorder 1, %s18
      %p163 = scmp.lt.s32.totalorder %s18, 3
      %p164 = pnand %p162, %p163
      %p165 = pneg %p164
      // Predicated region
      $region9: #{tpu_custom_call.1} parent=5 // pred_check
        _
      $region10: #{tpu_custom_call.1} parent=5 // pred_check_branch
        %167 = sbr.rel (%p164) target = $region12
      $region11: #{tpu_custom_call.1} parent=5 // pred_region
        %s168 = ssub.s32 %s18, 1
        // Predicated region
        $region13: #{tpu_custom_call.1} parent=11 // pred_check
          %p169 = pneg %p65
        $region14: #{tpu_custom_call.1} parent=11 // pred_check_branch
          %171 = sbr.rel (%p169) target = $region16
        $region15: #{tpu_custom_call.1} parent=11 // pred_region
          %s173 = ssub.s32 256, 256
          %174 = vsyncadd [#allocation6], %s173
          %s175 = sshll.u32 [#allocation5], 4
          %s176 = int_to_ptr.vmem [resolvable:$true] %s175
          %181 = dma.hbm_to_vmem [thread:$0]  %s1, 256, %s176, [#allocation6], 128, 128, 8
        $region16: #{tpu_custom_call.1} parent=11 // pred_fallthru
          _
        // Predicated region
        $region17: #{tpu_custom_call.1} parent=11 // pred_check
          %p182 = pneg %p86
        $region18: #{tpu_custom_call.1} parent=11 // pred_check_branch
          %184 = sbr.rel (%p182) target = $region20
        $region19: #{tpu_custom_call.1} parent=11 // pred_region
          _
        $region20: #{tpu_custom_call.1} parent=11 // pred_fallthru
          _
        // Predicated region
        $region21: #{tpu_custom_call.1} parent=11 // pred_check
          %p185 = pneg %p107
        $region22: #{tpu_custom_call.1} parent=11 // pred_check_branch
          %187 = sbr.rel (%p185) target = $region24
        $region23: #{tpu_custom_call.1} parent=11 // pred_region
          %s189 = ssub.s32 1024, 1024
          %190 = vsyncadd [#allocation6], %s189
          %s191 = sshll.u32 [#allocation7], 4
          %s192 = int_to_ptr.vmem [resolvable:$true] %s191
          %197 = dma.hbm_to_vmem [thread:$0]  %s3, 1024, %s192, [#allocation6], 128, 128, 8
        $region24: #{tpu_custom_call.1} parent=11 // pred_fallthru
          _
        // Predicated region
        $region25: #{tpu_custom_call.1} parent=11 // pred_check
          %p198 = pneg %p128
        $region26: #{tpu_custom_call.1} parent=11 // pred_check_branch
          %200 = sbr.rel (%p198) target = $region28
        $region27: #{tpu_custom_call.1} parent=11 // pred_region
          _
        $region28: #{tpu_custom_call.1} parent=11 // pred_fallthru
          _
      $region12: #{tpu_custom_call.1} parent=5 // pred_fallthru
        _
      %p201 = scmp.lt.s32.totalorder %s18, 2
      // Predicated region
      $region29: #{tpu_custom_call.1} parent=5 // pred_check
        %p202 = pneg %p201
      $region30: #{tpu_custom_call.1} parent=5 // pred_check_branch
        %204 = sbr.rel (%p202) target = $region32
      $region31: #{tpu_custom_call.1} parent=5 // pred_region
        // Predicated region
        $region33: #{tpu_custom_call.1} parent=31 // pred_check
          %p205 = pneg %p38
        $region34: #{tpu_custom_call.1} parent=31 // pred_check_branch
          %207 = sbr.rel (%p205) target = $region36
        $region35: #{tpu_custom_call.1} parent=31 // pred_region
          %s208 = sand.u32 %s28, 1
          %s209 = scalar_lea.sflag [#allocation3], %s208
          %s210 = sand.u32 %s28, 1
          %s211 = smul.addr %s210, 64
          %s212 = scalar_lea.vmem [#allocation2], %s211
          %s213 = smul.u32 8, %s18
          %s215 = ssub.s32 1024, 1024
          %216 = vsyncadd %s209, %s215
          %s217 = smul.addr %s213, 128
          %s218 = scalar_lea.hbm %s0, %s217
          %s219 = sshll.u32 %s212, 4
          %s220 = int_to_ptr.vmem [resolvable:$true] %s219
          %225 = dma.hbm_to_vmem [thread:$0]  %s218, 1024, %s220, %s209, 128, 128, 8
        $region36: #{tpu_custom_call.1} parent=31 // pred_fallthru
          _
      $region32: #{tpu_custom_call.1} parent=5 // pred_fallthru
        _
      %p226 = scmp.le.s32.totalorder 1, %s18
      %p227 = scmp.lt.s32.totalorder %s18, 3
      %p228 = pnand %p226, %p227
      %p229 = pneg %p228
      // Predicated region
      $region37: #{tpu_custom_call.1} parent=5 // pred_check
        _
      $region38: #{tpu_custom_call.1} parent=5 // pred_check_branch
        %231 = sbr.rel (%p228) target = $region40
      $region39: #{tpu_custom_call.1} parent=5 // pred_region
        %s232 = ssub.s32 %s18, 1
        %s233 = sand.u32 %s31, 1
        %s234 = scalar_lea.sflag [#allocation3], %s233
        %s235 = sand.u32 %s31, 1
        %s236 = smul.addr %s235, 64
        %s237 = scalar_lea.vmem [#allocation2], %s236
        // Predicated region
        $region41: #{tpu_custom_call.1} parent=39 // pred_check
          %p238 = pneg %p44
        $region42: #{tpu_custom_call.1} parent=39 // pred_check_branch
          %240 = sbr.rel (%p238) target = $region44
        $region43: #{tpu_custom_call.1} parent=39 // pred_region
          %241 = dma.done %s234, 1024
        $region44: #{tpu_custom_call.1} parent=39 // pred_fallthru
          _
        // Predicated region
        $region45: #{tpu_custom_call.1} parent=39 // pred_check
          %p242 = pneg %p65
        $region46: #{tpu_custom_call.1} parent=39 // pred_check_branch
          %244 = sbr.rel (%p242) target = $region48
        $region47: #{tpu_custom_call.1} parent=39 // pred_region
          %245 = dma.done [#allocation6], 256
        $region48: #{tpu_custom_call.1} parent=39 // pred_fallthru
          _
        // Predicated region
        $region49: #{tpu_custom_call.1} parent=39 // pred_check
          %p246 = pneg %p107
        $region50: #{tpu_custom_call.1} parent=39 // pred_check_branch
          %248 = sbr.rel (%p246) target = $region52
        $region51: #{tpu_custom_call.1} parent=39 // pred_region
          %249 = dma.done [#allocation6], 1024
        $region52: #{tpu_custom_call.1} parent=39 // pred_fallthru
          _
        %s250 = sand.u32 %s31, 1
        %s251 = scalar_lea.sflag [#allocation3], %s250
        %s252 = sand.u32 %s31, 1
        %s253 = smul.addr %s252, 64
        %s254 = scalar_lea.vmem [#allocation2], %s253
        %p255 = pneg %p44
        %p256 = pneg %p41
        %p257 = pneg %p65
        %p258 = pneg %p62
        %p259 = pneg %p86
        %p260 = pneg %p83
        %p261 = pneg %p107
        %p262 = pneg %p104
        %p263 = pneg %p128
        %p264 = pneg %p125
        %p265 = pneg %p154
        %p266 = pneg %p151
        %s267 = sand.u32 %s141, 1
        %s268 = scalar_lea.sflag [#allocation4], %s267
        %s269 = sand.u32 %s141, 1
        %s270 = smul.addr %s269, 8
        %s271 = scalar_lea.vmem [#allocation8], %s270
        %s272 = smul.u32 8, %s23
        %v273 = vld [vmem:[%s237] sm:$0xff]
        %v274 = vld [vmem:[%s237 + $0x8] sm:$0xff]
        %v275 = vld [vmem:[%s237 + $0x10] sm:$0xff]
        %v276 = vld [vmem:[%s237 + $0x18] sm:$0xff]
        %v277 = vld [vmem:[%s237 + $0x20] sm:$0xff]
        %v278 = vld [vmem:[%s237 + $0x28] sm:$0xff]
        %v279 = vld [vmem:[%s237 + $0x30] sm:$0xff]
        %v280 = vld [vmem:[%s237 + $0x38] sm:$0xff]
        %v281 = vld [vmem:[#allocation5] sm:$0xff]
        %v282 = vld [vmem:[#allocation5 + $0x8] sm:$0xff]
        %v283 = vld [vmem:[%s2] sm:$0x1]
        %v285 = vlaneseq
        %v286 = vshrl.u32 %v285, 7
        %v287 = vsub.s32 0, %v286
        %v288 = vrot.slane %v283, %v287
        %vm290 = vcmask 130048
        %v292 = vsel %vm290, %v273, 0
        %v295 = vsel %vm290, %v274, 0
        %v298 = vsel %vm290, %v275, 0
        %v301 = vsel %vm290, %v276, 0
        %v304 = vsel %vm290, %v277, 0
        %v307 = vsel %vm290, %v278, 0
        %v310 = vsel %vm290, %v279, 0
        %v313 = vsel %vm290, %v280, 0
        %315 = vmatprep.subr.mxu0 0.0
        %316 = vmatpush1.msra.mxu0 0.0
        %317 = vmatprep.subr.mxu0 0.0
        %318 = vmatpush1.msra.mxu0 0.0
        %319 = vmatprep.subr.mxu0 0.0
        %320 = vmatpush1.msra.mxu0 0.0
        %321 = vmatprep.subr.mxu0 0.0
        %322 = vmatpush1.msra.mxu0 0.0
        %323 = vmatprep.subr.mxu0 0.0
        %324 = vmatpush1.msra.mxu0 0.0
        %325 = vmatprep.subr.mxu0 0.0
        %326 = vmatpush1.msra.mxu0 0.0
        %327 = vmatprep.subr.mxu0 0.0
        %328 = vmatpush1.msra.mxu0 0.0
        %329 = vmatprep.subr.mxu0 0.0
        %330 = vmatpush1.msra.mxu0 0.0
        %331 = vmatprep.subr.mxu0 0.0
        %332 = vmatpush1.msra.mxu0 0.0
        %333 = vmatprep.subr.mxu0 0.0
        %334 = vmatpush1.msra.mxu0 0.0
        %335 = vmatprep.subr.mxu0 0.0
        %336 = vmatpush1.msra.mxu0 0.0
        %337 = vmatprep.subr.mxu0 0.0
        %338 = vmatpush1.msra.mxu0 0.0
        %339 = vmatprep.subr.mxu0 0.0
        %340 = vmatpush1.msra.mxu0 0.0
        %341 = vmatprep.subr.mxu0 0.0
        %342 = vmatpush1.msra.mxu0 0.0
        %343 = vmatprep.subr.mxu0 0.0
        %344 = vmatpush1.msra.mxu0 %v282
        %345 = vmatprep.subr.mxu0 0.0
        %346 = vmatpush1.msra.mxu0 %v281
        %347 = vmatprep.subr.mxu0 0.0
        %348 = vmatpush2.msra.mxu0 0.0
        %349 = vmatprep.subr.mxu0 0.0
        %350 = vmatpush2.msra.mxu0 0.0
        %351 = vmatprep.subr.mxu0 0.0
        %352 = vmatpush2.msra.mxu0 0.0
        %353 = vmatprep.subr.mxu0 0.0
        %354 = vmatpush2.msra.mxu0 0.0
        %355 = vmatprep.subr.mxu0 0.0
        %356 = vmatpush2.msra.mxu0 0.0
        %357 = vmatprep.subr.mxu0 0.0
        %358 = vmatpush2.msra.mxu0 0.0
        %359 = vmatprep.subr.mxu0 0.0
        %360 = vmatpush2.msra.mxu0 0.0
        %361 = vmatprep.subr.mxu0 0.0
        %362 = vmatpush2.msra.mxu0 0.0
        %363 = vmatprep.subr.mxu0 0.0
        %364 = vmatpush2.msra.mxu0 0.0
        %365 = vmatprep.subr.mxu0 0.0
        %366 = vmatpush2.msra.mxu0 0.0
        %367 = vmatprep.subr.mxu0 0.0
        %368 = vmatpush2.msra.mxu0 0.0
        %369 = vmatprep.subr.mxu0 0.0
        %370 = vmatpush2.msra.mxu0 0.0
        %371 = vmatprep.subr.mxu0 0.0
        %372 = vmatpush2.msra.mxu0 0.0
        %373 = vmatprep.subr.mxu0 0.0
        %374 = vmatpush2.msra.mxu0 0.0
        %375 = vmatprep.subr.mxu0 0.0
        %376 = vmatpush2.msra.mxu0 0.0
        %377 = vmatprep.subr.mxu0 0.0
        %378 = vmatpush2.msra.mxu0 0.0
        %379 = vmatprep.mubr.f32.mxu0 0.0
        %380 = vmatmul.mubr.f32.gmra.mxu0 %v292
        %v381 = vpop.f32.mrf.mxu0
        %v382 = vadd.f32 %v288, %v381
        %v383 = vpop.f32.mrf.mxu0
        %384 = vmatprep.mubr.f32.mxu0 0.0
        %385 = vmatmul.mubr.f32.gmra.mxu0 %v295
        %v386 = vpop.f32.mrf.mxu0
        %v387 = vadd.f32 %v288, %v386
        %v388 = vpop.f32.mrf.mxu0
        %389 = vmatprep.mubr.f32.mxu0 0.0
        %390 = vmatmul.mubr.f32.gmra.mxu0 %v298
        %v391 = vpop.f32.mrf.mxu0
        %v392 = vadd.f32 %v288, %v391
        %v393 = vpop.f32.mrf.mxu0
        %394 = vmatprep.mubr.f32.mxu0 0.0
        %395 = vmatmul.mubr.f32.gmra.mxu0 %v301
        %v396 = vpop.f32.mrf.mxu0
        %v397 = vadd.f32 %v288, %v396
        %v398 = vpop.f32.mrf.mxu0
        %399 = vmatprep.mubr.f32.mxu0 0.0
        %400 = vmatmul.mubr.f32.gmra.mxu0 %v304
        %v401 = vpop.f32.mrf.mxu0
        %v402 = vadd.f32 %v288, %v401
        %v403 = vpop.f32.mrf.mxu0
        %404 = vmatprep.mubr.f32.mxu0 0.0
        %405 = vmatmul.mubr.f32.gmra.mxu0 %v307
        %v406 = vpop.f32.mrf.mxu0
        %v407 = vadd.f32 %v288, %v406
        %v408 = vpop.f32.mrf.mxu0
        %409 = vmatprep.mubr.f32.mxu0 0.0
        %410 = vmatmul.mubr.f32.gmra.mxu0 %v310
        %v411 = vpop.f32.mrf.mxu0
        %v412 = vadd.f32 %v288, %v411
        %v413 = vpop.f32.mrf.mxu0
        %414 = vmatprep.mubr.f32.mxu0 0.0
        %415 = vmatmul.mubr.f32.gmra.mxu0 %v313
        %v416 = vpop.f32.mrf.mxu0
        %v417 = vadd.f32 %v288, %v416
        %v418 = vpop.f32.mrf.mxu0
        %419 = vdwg.mxu0
        %v420 = vsel %vm290, %v382, 0.0
        %v421 = vrot.slane %v420, 4
        %v422 = vadd.f32 %v420, %v421
        %v423 = vrot.slane %v422, 2
        %v424 = vadd.f32 %v422, %v423
        %v425 = vrot.slane %v424, 1
        %v426 = vadd.f32 %v424, %v425
        %v427 = vsel %vm290, %v387, 0.0
        %v428 = vrot.slane %v427, 4
        %v429 = vadd.f32 %v427, %v428
        %v430 = vrot.slane %v429, 2
        %v431 = vadd.f32 %v429, %v430
        %v432 = vrot.slane %v431, 1
        %v433 = vadd.f32 %v431, %v432
        %v434 = vsel %vm290, %v392, 0.0
        %v435 = vrot.slane %v434, 4
        %v436 = vadd.f32 %v434, %v435
        %v437 = vrot.slane %v436, 2
        %v438 = vadd.f32 %v436, %v437
        %v439 = vrot.slane %v438, 1
        %v440 = vadd.f32 %v438, %v439
        %v441 = vsel %vm290, %v397, 0.0
        %v442 = vrot.slane %v441, 4
        %v443 = vadd.f32 %v441, %v442
        %v444 = vrot.slane %v443, 2
        %v445 = vadd.f32 %v443, %v444
        %v446 = vrot.slane %v445, 1
        %v447 = vadd.f32 %v445, %v446
        %v448 = vsel %vm290, %v402, 0.0
        %v449 = vrot.slane %v448, 4
        %v450 = vadd.f32 %v448, %v449
        %v451 = vrot.slane %v450, 2
        %v452 = vadd.f32 %v450, %v451
        %v453 = vrot.slane %v452, 1
        %v454 = vadd.f32 %v452, %v453
        %v455 = vsel %vm290, %v407, 0.0
        %v456 = vrot.slane %v455, 4
        %v457 = vadd.f32 %v455, %v456
        %v458 = vrot.slane %v457, 2
        %v459 = vadd.f32 %v457, %v458
        %v460 = vrot.slane %v459, 1
        %v461 = vadd.f32 %v459, %v460
        %v462 = vsel %vm290, %v412, 0.0
        %v463 = vrot.slane %v462, 4
        %v464 = vadd.f32 %v462, %v463
        %v465 = vrot.slane %v464, 2
        %v466 = vadd.f32 %v464, %v465
        %v467 = vrot.slane %v466, 1
        %v468 = vadd.f32 %v466, %v467
        %v469 = vsel %vm290, %v417, 0.0
        %v470 = vrot.slane %v469, 4
        %v471 = vadd.f32 %v469, %v470
        %v472 = vrot.slane %v471, 2
        %v473 = vadd.f32 %v471, %v472
        %v474 = vrot.slane %v473, 1
        %v475 = vadd.f32 %v473, %v474
        %v476 = vrcp.pop 8.0
        %v477 = vmul.f32 %v426, %v476
        %v478 = vmul.f32 %v433, %v476
        %v479 = vmul.f32 %v440, %v476
        %v480 = vmul.f32 %v447, %v476
        %v481 = vmul.f32 %v454, %v476
        %v482 = vmul.f32 %v461, %v476
        %v483 = vmul.f32 %v468, %v476
        %v484 = vmul.f32 %v475, %v476
        %v485 = vsub.f32 %v382, %v477
        %v486 = vsub.f32 %v387, %v478
        %v487 = vsub.f32 %v392, %v479
        %v488 = vsub.f32 %v397, %v480
        %v489 = vsub.f32 %v402, %v481
        %v490 = vsub.f32 %v407, %v482
        %v491 = vsub.f32 %v412, %v483
        %v492 = vsub.f32 %v417, %v484
        %v493 = vmul.f32 %v485, %v485
        %v494 = vmul.f32 %v486, %v486
        %v495 = vmul.f32 %v487, %v487
        %v496 = vmul.f32 %v488, %v488
        %v497 = vmul.f32 %v489, %v489
        %v498 = vmul.f32 %v490, %v490
        %v499 = vmul.f32 %v491, %v491
        %v500 = vmul.f32 %v492, %v492
        %v501 = vsel %vm290, %v493, 0.0
        %v502 = vrot.slane %v501, 4
        %v503 = vadd.f32 %v501, %v502
        %v504 = vrot.slane %v503, 2
        %v505 = vadd.f32 %v503, %v504
        %v506 = vrot.slane %v505, 1
        %v507 = vadd.f32 %v505, %v506
        %v508 = vsel %vm290, %v494, 0.0
        %v509 = vrot.slane %v508, 4
        %v510 = vadd.f32 %v508, %v509
        %v511 = vrot.slane %v510, 2
        %v512 = vadd.f32 %v510, %v511
        %v513 = vrot.slane %v512, 1
        %v514 = vadd.f32 %v512, %v513
        %v515 = vsel %vm290, %v495, 0.0
        %v516 = vrot.slane %v515, 4
        %v517 = vadd.f32 %v515, %v516
        %v518 = vrot.slane %v517, 2
        %v519 = vadd.f32 %v517, %v518
        %v520 = vrot.slane %v519, 1
        %v521 = vadd.f32 %v519, %v520
        %v522 = vsel %vm290, %v496, 0.0
        %v523 = vrot.slane %v522, 4
        %v524 = vadd.f32 %v522, %v523
        %v525 = vrot.slane %v524, 2
        %v526 = vadd.f32 %v524, %v525
        %v527 = vrot.slane %v526, 1
        %v528 = vadd.f32 %v526, %v527
        %v529 = vsel %vm290, %v497, 0.0
        %v530 = vrot.slane %v529, 4
        %v531 = vadd.f32 %v529, %v530
        %v532 = vrot.slane %v531, 2
        %v533 = vadd.f32 %v531, %v532
        %v534 = vrot.slane %v533, 1
        %v535 = vadd.f32 %v533, %v534
        %v536 = vsel %vm290, %v498, 0.0
        %v537 = vrot.slane %v536, 4
        %v538 = vadd.f32 %v536, %v537
        %v539 = vrot.slane %v538, 2
        %v540 = vadd.f32 %v538, %v539
        %v541 = vrot.slane %v540, 1
        %v542 = vadd.f32 %v540, %v541
        %v543 = vsel %vm290, %v499, 0.0
        %v544 = vrot.slane %v543, 4
        %v545 = vadd.f32 %v543, %v544
        %v546 = vrot.slane %v545, 2
        %v547 = vadd.f32 %v545, %v546
        %v548 = vrot.slane %v547, 1
        %v549 = vadd.f32 %v547, %v548
        %v550 = vsel %vm290, %v500, 0.0
        %v551 = vrot.slane %v550, 4
        %v552 = vadd.f32 %v550, %v551
        %v553 = vrot.slane %v552, 2
        %v554 = vadd.f32 %v552, %v553
        %v555 = vrot.slane %v554, 1
        %v556 = vadd.f32 %v554, %v555
        %v557 = vrcp.pop 7.0
        %v558 = vmul.f32 %v507, %v557
        %v559 = vmul.f32 %v514, %v557
        %v560 = vmul.f32 %v521, %v557
        %v561 = vmul.f32 %v528, %v557
        %v562 = vmul.f32 %v535, %v557
        %v563 = vmul.f32 %v542, %v557
        %v564 = vmul.f32 %v549, %v557
        %v565 = vmul.f32 %v556, %v557
        %v566 = vrsqrt.pop %v558
        %v567 = vmul.f32 %v558, %v566
        %vm568 = vcmp.eq.f32.partialorder %v558, inf
        %v569 = vsel %vm568, %v558, %v567
        %vm570 = vcmp.eq.f32.partialorder %v558, 0.0
        %v571 = vand.u32 %v558, 2147483648
        %v572 = vsel %vm570, %v571, %v569
        %v573 = vrsqrt.pop %v559
        %v574 = vmul.f32 %v559, %v573
        %vm575 = vcmp.eq.f32.partialorder %v559, inf
        %v576 = vsel %vm575, %v559, %v574
        %vm577 = vcmp.eq.f32.partialorder %v559, 0.0
        %v578 = vand.u32 %v559, 2147483648
        %v579 = vsel %vm577, %v578, %v576
        %v580 = vrsqrt.pop %v560
        %v581 = vmul.f32 %v560, %v580
        %vm582 = vcmp.eq.f32.partialorder %v560, inf
        %v583 = vsel %vm582, %v560, %v581
        %vm584 = vcmp.eq.f32.partialorder %v560, 0.0
        %v585 = vand.u32 %v560, 2147483648
        %v586 = vsel %vm584, %v585, %v583
        %v587 = vrsqrt.pop %v561
        %v588 = vmul.f32 %v561, %v587
        %vm589 = vcmp.eq.f32.partialorder %v561, inf
        %v590 = vsel %vm589, %v561, %v588
        %vm591 = vcmp.eq.f32.partialorder %v561, 0.0
        %v592 = vand.u32 %v561, 2147483648
        %v593 = vsel %vm591, %v592, %v590
        %v594 = vrsqrt.pop %v562
        %v595 = vmul.f32 %v562, %v594
        %vm596 = vcmp.eq.f32.partialorder %v562, inf
        %v597 = vsel %vm596, %v562, %v595
        %vm598 = vcmp.eq.f32.partialorder %v562, 0.0
        %v599 = vand.u32 %v562, 2147483648
        %v600 = vsel %vm598, %v599, %v597
        %v601 = vrsqrt.pop %v563
        %v602 = vmul.f32 %v563, %v601
        %vm603 = vcmp.eq.f32.partialorder %v563, inf
        %v604 = vsel %vm603, %v563, %v602
        %vm605 = vcmp.eq.f32.partialorder %v563, 0.0
        %v606 = vand.u32 %v563, 2147483648
        %v607 = vsel %vm605, %v606, %v604
        %v608 = vrsqrt.pop %v564
        %v609 = vmul.f32 %v564, %v608
        %vm610 = vcmp.eq.f32.partialorder %v564, inf
        %v611 = vsel %vm610, %v564, %v609
        %vm612 = vcmp.eq.f32.partialorder %v564, 0.0
        %v613 = vand.u32 %v564, 2147483648
        %v614 = vsel %vm612, %v613, %v611
        %v615 = vrsqrt.pop %v565
        %v616 = vmul.f32 %v565, %v615
        %vm617 = vcmp.eq.f32.partialorder %v565, inf
        %v618 = vsel %vm617, %v565, %v616
        %vm619 = vcmp.eq.f32.partialorder %v565, 0.0
        %v620 = vand.u32 %v565, 2147483648
        %v621 = vsel %vm619, %v620, %v618
        %v622 = vrcp.pop %v572
        %v623 = vrcp.pop %v579
        %v624 = vrcp.pop %v586
        %v625 = vrcp.pop %v593
        %v626 = vrcp.pop %v600
        %v627 = vrcp.pop %v607
        %v628 = vrcp.pop %v614
        %v629 = vrcp.pop %v621
        %v630 = vmul.f32 %v485, %v622
        %v631 = vmul.f32 %v486, %v623
        %v632 = vmul.f32 %v487, %v624
        %v633 = vmul.f32 %v488, %v625
        %v634 = vmul.f32 %v489, %v626
        %v635 = vmul.f32 %v490, %v627
        %v636 = vmul.f32 %v491, %v628
        %v637 = vmul.f32 %v492, %v629
        %v638 = vmul.f32 %v630, %v630
        %v639 = vmul.f32 %v631, %v631
        %v640 = vmul.f32 %v632, %v632
        %v641 = vmul.f32 %v633, %v633
        %v642 = vmul.f32 %v634, %v634
        %v643 = vmul.f32 %v635, %v635
        %v644 = vmul.f32 %v636, %v636
        %v645 = vmul.f32 %v637, %v637
        %v646 = vmul.f32 %v638, %v630
        %v647 = vmul.f32 %v639, %v631
        %v648 = vmul.f32 %v640, %v632
        %v649 = vmul.f32 %v641, %v633
        %v650 = vmul.f32 %v642, %v634
        %v651 = vmul.f32 %v643, %v635
        %v652 = vmul.f32 %v644, %v636
        %v653 = vmul.f32 %v645, %v637
        %v654 = vsel %vm290, %v646, 0.0
        %v655 = vrot.slane %v654, 4
        %v656 = vadd.f32 %v654, %v655
        %v657 = vrot.slane %v656, 2
        %v658 = vadd.f32 %v656, %v657
        %v659 = vrot.slane %v658, 1
        %v660 = vadd.f32 %v658, %v659
        %v661 = vsel %vm290, %v647, 0.0
        %v662 = vrot.slane %v661, 4
        %v663 = vadd.f32 %v661, %v662
        %v664 = vrot.slane %v663, 2
        %v665 = vadd.f32 %v663, %v664
        %v666 = vrot.slane %v665, 1
        %v667 = vadd.f32 %v665, %v666
        %v668 = vsel %vm290, %v648, 0.0
        %v669 = vrot.slane %v668, 4
        %v670 = vadd.f32 %v668, %v669
        %v671 = vrot.slane %v670, 2
        %v672 = vadd.f32 %v670, %v671
        %v673 = vrot.slane %v672, 1
        %v674 = vadd.f32 %v672, %v673
        %v675 = vsel %vm290, %v649, 0.0
        %v676 = vrot.slane %v675, 4
        %v677 = vadd.f32 %v675, %v676
        %v678 = vrot.slane %v677, 2
        %v679 = vadd.f32 %v677, %v678
        %v680 = vrot.slane %v679, 1
        %v681 = vadd.f32 %v679, %v680
        %v682 = vsel %vm290, %v650, 0.0
        %v683 = vrot.slane %v682, 4
        %v684 = vadd.f32 %v682, %v683
        %v685 = vrot.slane %v684, 2
        %v686 = vadd.f32 %v684, %v685
        %v687 = vrot.slane %v686, 1
        %v688 = vadd.f32 %v686, %v687
        %v689 = vsel %vm290, %v651, 0.0
        %v690 = vrot.slane %v689, 4
        %v691 = vadd.f32 %v689, %v690
        %v692 = vrot.slane %v691, 2
        %v693 = vadd.f32 %v691, %v692
        %v694 = vrot.slane %v693, 1
        %v695 = vadd.f32 %v693, %v694
        %v696 = vsel %vm290, %v652, 0.0
        %v697 = vrot.slane %v696, 4
        %v698 = vadd.f32 %v696, %v697
        %v699 = vrot.slane %v698, 2
        %v700 = vadd.f32 %v698, %v699
        %v701 = vrot.slane %v700, 1
        %v702 = vadd.f32 %v700, %v701
        %v703 = vsel %vm290, %v653, 0.0
        %v704 = vrot.slane %v703, 4
        %v705 = vadd.f32 %v703, %v704
        %v706 = vrot.slane %v705, 2
        %v707 = vadd.f32 %v705, %v706
        %v708 = vrot.slane %v707, 1
        %v709 = vadd.f32 %v707, %v708
        %v710 = vmul.f32 %v660, %v476
        %v711 = vmul.f32 %v667, %v476
        %v712 = vmul.f32 %v674, %v476
        %v713 = vmul.f32 %v681, %v476
        %v714 = vmul.f32 %v688, %v476
        %v715 = vmul.f32 %v695, %v476
        %v716 = vmul.f32 %v702, %v476
        %v717 = vmul.f32 %v709, %v476
        %v718 = vmul.f32 %v646, %v630
        %v719 = vmul.f32 %v647, %v631
        %v720 = vmul.f32 %v648, %v632
        %v721 = vmul.f32 %v649, %v633
        %v722 = vmul.f32 %v650, %v634
        %v723 = vmul.f32 %v651, %v635
        %v724 = vmul.f32 %v652, %v636
        %v725 = vmul.f32 %v653, %v637
        %v726 = vsel %vm290, %v718, 0.0
        %v727 = vrot.slane %v726, 4
        %v728 = vadd.f32 %v726, %v727
        %v729 = vrot.slane %v728, 2
        %v730 = vadd.f32 %v728, %v729
        %v731 = vrot.slane %v730, 1
        %v732 = vadd.f32 %v730, %v731
        %v733 = vsel %vm290, %v719, 0.0
        %v734 = vrot.slane %v733, 4
        %v735 = vadd.f32 %v733, %v734
        %v736 = vrot.slane %v735, 2
        %v737 = vadd.f32 %v735, %v736
        %v738 = vrot.slane %v737, 1
        %v739 = vadd.f32 %v737, %v738
        %v740 = vsel %vm290, %v720, 0.0
        %v741 = vrot.slane %v740, 4
        %v742 = vadd.f32 %v740, %v741
        %v743 = vrot.slane %v742, 2
        %v744 = vadd.f32 %v742, %v743
        %v745 = vrot.slane %v744, 1
        %v746 = vadd.f32 %v744, %v745
        %v747 = vsel %vm290, %v721, 0.0
        %v748 = vrot.slane %v747, 4
        %v749 = vadd.f32 %v747, %v748
        %v750 = vrot.slane %v749, 2
        %v751 = vadd.f32 %v749, %v750
        %v752 = vrot.slane %v751, 1
        %v753 = vadd.f32 %v751, %v752
        %v754 = vsel %vm290, %v722, 0.0
        %v755 = vrot.slane %v754, 4
        %v756 = vadd.f32 %v754, %v755
        %v757 = vrot.slane %v756, 2
        %v758 = vadd.f32 %v756, %v757
        %v759 = vrot.slane %v758, 1
        %v760 = vadd.f32 %v758, %v759
        %v761 = vsel %vm290, %v723, 0.0
        %v762 = vrot.slane %v761, 4
        %v763 = vadd.f32 %v761, %v762
        %v764 = vrot.slane %v763, 2
        %v765 = vadd.f32 %v763, %v764
        %v766 = vrot.slane %v765, 1
        %v767 = vadd.f32 %v765, %v766
        %v768 = vsel %vm290, %v724, 0.0
        %v769 = vrot.slane %v768, 4
        %v770 = vadd.f32 %v768, %v769
        %v771 = vrot.slane %v770, 2
        %v772 = vadd.f32 %v770, %v771
        %v773 = vrot.slane %v772, 1
        %v774 = vadd.f32 %v772, %v773
        %v775 = vsel %vm290, %v725, 0.0
        %v776 = vrot.slane %v775, 4
        %v777 = vadd.f32 %v775, %v776
        %v778 = vrot.slane %v777, 2
        %v779 = vadd.f32 %v777, %v778
        %v780 = vrot.slane %v779, 1
        %v781 = vadd.f32 %v779, %v780
        %v782 = vmul.f32 %v732, %v476
        %v783 = vmul.f32 %v739, %v476
        %v784 = vmul.f32 %v746, %v476
        %v785 = vmul.f32 %v753, %v476
        %v786 = vmul.f32 %v760, %v476
        %v787 = vmul.f32 %v767, %v476
        %v788 = vmul.f32 %v774, %v476
        %v789 = vmul.f32 %v781, %v476
        %vm798 = vcmask 1041409
        %v799 = vsel %vm798, %v478, %v477
        %vm800 = vcmask 1042434
        %v801 = vsel %vm800, %v479, %v799
        %vm802 = vcmask 1043459
        %v803 = vsel %vm802, %v480, %v801
        %vm804 = vcmask 1044484
        %v805 = vsel %vm804, %v481, %v803
        %vm806 = vcmask 1045509
        %v807 = vsel %vm806, %v482, %v805
        %vm808 = vcmask 1046534
        %v809 = vsel %vm808, %v483, %v807
        %vm810 = vcmask 1047559
        %v811 = vsel %vm810, %v484, %v809
        %v821 = vsel %vm798, %v579, %v572
        %v822 = vsel %vm800, %v586, %v821
        %v823 = vsel %vm802, %v593, %v822
        %v824 = vsel %vm804, %v600, %v823
        %v825 = vsel %vm806, %v607, %v824
        %v826 = vsel %vm808, %v614, %v825
        %v827 = vsel %vm810, %v621, %v826
        %828 = vrot.lane.b32.xlu0 %v827, 16
        %v829 = vpop.permute.xlu0 %828
        %v839 = vsel %vm798, %v711, %v710
        %v840 = vsel %vm800, %v712, %v839
        %v841 = vsel %vm802, %v713, %v840
        %v842 = vsel %vm804, %v714, %v841
        %v843 = vsel %vm806, %v715, %v842
        %v844 = vsel %vm808, %v716, %v843
        %v845 = vsel %vm810, %v717, %v844
        %846 = vrot.lane.b32.xlu0 %v845, 32
        %v847 = vpop.permute.xlu0 %846
        %v857 = vsel %vm798, %v783, %v782
        %v858 = vsel %vm800, %v784, %v857
        %v859 = vsel %vm802, %v785, %v858
        %v860 = vsel %vm804, %v786, %v859
        %v861 = vsel %vm806, %v787, %v860
        %v862 = vsel %vm808, %v788, %v861
        %v863 = vsel %vm810, %v789, %v862
        %864 = vrot.lane.b32.xlu0 %v863, 48
        %v865 = vpop.permute.xlu0 %864
        %v867 = vsel %vm290, %v811, %v829
        %vm868 = vcmask 261120
        %v869 = vsel %vm868, %v867, %v847
        %vm870 = vcmask 392192
        %v871 = vsel %vm870, %v869, %v865
        %v872 = vld [vmem:[#allocation7] sm:$0xff]
        %v873 = vld [vmem:[#allocation7 + $0x8] sm:$0xff]
        %v874 = vld [vmem:[#allocation7 + $0x10] sm:$0xff]
        %v875 = vld [vmem:[#allocation7 + $0x18] sm:$0xff]
        %v876 = vld [vmem:[#allocation7 + $0x20] sm:$0xff]
        %v877 = vld [vmem:[#allocation7 + $0x28] sm:$0xff]
        %v878 = vld [vmem:[#allocation7 + $0x30] sm:$0xff]
        %v879 = vld [vmem:[#allocation7 + $0x38] sm:$0xff]
        %v880 = vld [vmem:[%s4] sm:$0x1]
        %v882 = vlaneseq
        %v883 = vshrl.u32 %v882, 7
        %v884 = vsub.s32 0, %v883
        %v885 = vrot.slane %v880, %v884
        %vm887 = vcmask 523264
        %v889 = vsel %vm887, %v871, 0
        %891 = vmatprep.subr.mxu0 0.0
        %892 = vmatpush1.msra.mxu0 0.0
        %893 = vmatprep.subr.mxu0 0.0
        %894 = vmatpush1.msra.mxu0 0.0
        %895 = vmatprep.subr.mxu0 0.0
        %896 = vmatpush1.msra.mxu0 0.0
        %897 = vmatprep.subr.mxu0 0.0
        %898 = vmatpush1.msra.mxu0 0.0
        %899 = vmatprep.subr.mxu0 0.0
        %900 = vmatpush1.msra.mxu0 0.0
        %901 = vmatprep.subr.mxu0 0.0
        %902 = vmatpush1.msra.mxu0 0.0
        %903 = vmatprep.subr.mxu0 0.0
        %904 = vmatpush1.msra.mxu0 0.0
        %905 = vmatprep.subr.mxu0 0.0
        %906 = vmatpush1.msra.mxu0 0.0
        %907 = vmatprep.subr.mxu0 0.0
        %908 = vmatpush1.msra.mxu0 %v879
        %909 = vmatprep.subr.mxu0 0.0
        %910 = vmatpush1.msra.mxu0 %v878
        %911 = vmatprep.subr.mxu0 0.0
        %912 = vmatpush1.msra.mxu0 %v877
        %913 = vmatprep.subr.mxu0 0.0
        %914 = vmatpush1.msra.mxu0 %v876
        %915 = vmatprep.subr.mxu0 0.0
        %916 = vmatpush1.msra.mxu0 %v875
        %917 = vmatprep.subr.mxu0 0.0
        %918 = vmatpush1.msra.mxu0 %v874
        %919 = vmatprep.subr.mxu0 0.0
        %920 = vmatpush1.msra.mxu0 %v873
        %921 = vmatprep.subr.mxu0 0.0
        %922 = vmatpush1.msra.mxu0 %v872
        %923 = vmatprep.subr.mxu0 0.0
        %924 = vmatpush2.msra.mxu0 0.0
        %925 = vmatprep.subr.mxu0 0.0
        %926 = vmatpush2.msra.mxu0 0.0
        %927 = vmatprep.subr.mxu0 0.0
        %928 = vmatpush2.msra.mxu0 0.0
        %929 = vmatprep.subr.mxu0 0.0
        %930 = vmatpush2.msra.mxu0 0.0
        %931 = vmatprep.subr.mxu0 0.0
        %932 = vmatpush2.msra.mxu0 0.0
        %933 = vmatprep.subr.mxu0 0.0
        %934 = vmatpush2.msra.mxu0 0.0
        %935 = vmatprep.subr.mxu0 0.0
        %936 = vmatpush2.msra.mxu0 0.0
        %937 = vmatprep.subr.mxu0 0.0
        %938 = vmatpush2.msra.mxu0 0.0
        %939 = vmatprep.subr.mxu0 0.0
        %940 = vmatpush2.msra.mxu0 0.0
        %941 = vmatprep.subr.mxu0 0.0
        %942 = vmatpush2.msra.mxu0 0.0
        %943 = vmatprep.subr.mxu0 0.0
        %944 = vmatpush2.msra.mxu0 0.0
        %945 = vmatprep.subr.mxu0 0.0
        %946 = vmatpush2.msra.mxu0 0.0
        %947 = vmatprep.subr.mxu0 0.0
        %948 = vmatpush2.msra.mxu0 0.0
        %949 = vmatprep.subr.mxu0 0.0
        %950 = vmatpush2.msra.mxu0 0.0
        %951 = vmatprep.subr.mxu0 0.0
        %952 = vmatpush2.msra.mxu0 0.0
        %953 = vmatprep.subr.mxu0 0.0
        %954 = vmatpush2.msra.mxu0 0.0
        %955 = vmatprep.mubr.f32.mxu0 0.0
        %956 = vmatmul.mubr.f32.gmra.mxu0 %v889
        %v957 = vpop.f32.mrf.mxu0
        %v958 = vadd.f32 %v885, %v957
        %v959 = vpop.f32.mrf.mxu0
        %960 = vdwg.mxu0
        %961 = vst.msk [vmem:[%s271] sm:$0xff] %vm887, %v958
        %s962 = sand.u32 %s141, 1
        %s963 = scalar_lea.sflag [#allocation4], %s962
        %s964 = sand.u32 %s141, 1
        %s965 = smul.addr %s964, 8
        %s966 = scalar_lea.vmem [#allocation8], %s965
        // Predicated region
        $region53: #{tpu_custom_call.1} parent=39 // pred_check
          %p967 = pneg %p151
        $region54: #{tpu_custom_call.1} parent=39 // pred_check_branch
          %969 = sbr.rel (%p967) target = $region56
        $region55: #{tpu_custom_call.1} parent=39 // pred_region
          %s971 = ssub.s32 128, 128
          %972 = vsyncadd %s963, %s971
          %s973 = smul.addr %s23, 128
          %s974 = scalar_lea.hbm %s5, %s973
          %s976 = sshll.u32 %s966, 4
          %s977 = int_to_ptr.vmem [resolvable:$true] %s976
          %979 = dma.vmem_to_hbm [thread:$0]  %s977, 128, %s974, %s963
        $region56: #{tpu_custom_call.1} parent=39 // pred_fallthru
          _
      $region40: #{tpu_custom_call.1} parent=5 // pred_fallthru
        _
      %p980 = scmp.le.s32.totalorder 2, %s18
      // Predicated region
      $region57: #{tpu_custom_call.1} parent=5 // pred_check
        %p981 = pneg %p980
      $region58: #{tpu_custom_call.1} parent=5 // pred_check_branch
        %983 = sbr.rel (%p981) target = $region60
      $region59: #{tpu_custom_call.1} parent=5 // pred_region
        %s984 = ssub.s32 %s18, 2
        // Predicated region
        $region61: #{tpu_custom_call.1} parent=59 // pred_check
          %p985 = pneg %p157
        $region62: #{tpu_custom_call.1} parent=59 // pred_check_branch
          %987 = sbr.rel (%p985) target = $region64
        $region63: #{tpu_custom_call.1} parent=59 // pred_region
          %s988 = sand.u32 %s142, 1
          %s989 = scalar_lea.sflag [#allocation4], %s988
          %s990 = sand.u32 %s142, 1
          %s991 = smul.addr %s990, 8
          %s992 = scalar_lea.vmem [#allocation8], %s991
          %993 = dma.done %s989, 128
        $region64: #{tpu_custom_call.1} parent=59 // pred_fallthru
          _
      $region60: #{tpu_custom_call.1} parent=5 // pred_fallthru
        _
    $region6: #{tpu_custom_call.1} parent=1 // loop_footer
      %s22 = sadd.s32 1, %s18
    $region7: #{tpu_custom_call.1} parent=1 // loop_footer_branch
      %17 = sbr.rel target = $region3
    $region8: #{tpu_custom_call.1} parent=1 // loop_exit
      _
    %994 = vsyncpa [#allocation3], 1
    %s995 = scalar_lea.sflag [#allocation3], 1
    %996 = vsyncpa %s995, 1
    %997 = vsyncpa [#allocation6], 1
    %998 = vsyncpa [#allocation4], 1
    %s999 = scalar_lea.sflag [#allocation4], 1
    %1000 = vsyncpa %s999, 1

</llo_original>
